<compile_context>
chip_gen: v7x
topology: tpu7x:2x2x1
jax: 0.10.0
libtpu: 0.0.40
codegen_flags: <defaults>
</compile_context>

<pallas_src>
import functools

import jax
import jax.numpy as jnp
from jax.experimental import pallas as pl
from jax.experimental.pallas import tpu as pltpu


def _reduce_kernel(x_ref, inv_ref, *, rows, inv_n):
    """Accumulate per-batch sum-of-squares in f32; finalize inv = rsqrt(sumsq/n)."""
    r = pl.program_id(1)

    @pl.when(r == 0)
    def _():
        inv_ref[...] = jnp.zeros_like(inv_ref)

    x = x_ref[...].astype(jnp.float32)            # (TS, C)
    ts = x.shape[0]
    if rows % ts != 0:
        # Mask out-of-bounds rows of the (padded) last tile.
        row_ids = jax.lax.broadcasted_iota(jnp.int32, x.shape, 0) + r * ts
        x = jnp.where(row_ids < rows, x, 0.0)
    inv_ref[...] = inv_ref[...] + jnp.sum(x * x)

    @pl.when(r == pl.num_programs(1) - 1)
    def _():
        inv_ref[...] = jax.lax.rsqrt(inv_ref[...] * jnp.float32(inv_n))


def _apply_kernel(x_ref, scale_ref, inv_ref, o_ref):
    # Keep the elementwise math in the input dtype (bf16 math on v6e/v7x when
    # inputs are bf16; f32 when inputs are f32). inv_ref is a (1, 1) f32 block.
    x = x_ref[...]                                # (TS, C)
    s = scale_ref[...].astype(x.dtype)            # (TS, C)
    inv = inv_ref[...].astype(x.dtype)            # (1, 1) -> broadcasts
    o_ref[...] = (x * s * inv).astype(o_ref.dtype)


def _pick_tile_rows(rows, cols, bytes_per_elem_sum):
    """Largest row tile whose single-copy footprint fits the budget (mult of 8)."""
    tile_budget = 12 * 1024 * 1024   # single copy; ~2x with double-buffering
    ts = tile_budget // max(1, cols * bytes_per_elem_sum)
    if ts >= rows:
        return rows
    return max(8, (ts // 8) * 8)


def _vmem_limit(buffered_bytes):
    # explicit scoped-VMEM limit with headroom; stays well under v7x's 64 MiB.
    return int(min(max(int(buffered_bytes * 1.5) + (4 << 20), 16 << 20), 48 << 20))


def rmsnorm(x, scale):
    B, S, D = x.shape
    assert scale.shape[0] >= S and scale.shape[1] == D
    scale_used = scale[:S, :]                     # matches self.scale[:x.shape[1], :]
    out_dtype = x.dtype
    n = S * D                                     # x[0].numel()

    # Working per-batch 2-D layout (R, C): prefer a lane-dense last dim.
    if D % 128 == 0 or (S * D) % 128 != 0:
        R, C = S, D
        x2, scale2 = x, scale_used
    else:
        # layout-preserving (row-major) reshape to 128-wide rows
        R, C = (S * D) // 128, 128
        x2 = x.reshape(B, R, C)
        scale2 = scale_used.reshape(R, C)

    xb = x2.dtype.itemsize
    sb = scale2.dtype.itemsize
    ob = jnp.dtype(out_dtype).itemsize

    # ------------- pass 1: per-batch inv = rsqrt(mean(x^2)) -------------
    ts_r = _pick_tile_rows(R, C, xb)
    grid_r = (B, pl.cdiv(R, ts_r))
    # NOTE: with B < number of TensorCores (v7x), the reduce pass uses one core;
    # a cross-core combine over the row axis could recover that, omitted here.
    inv = pl.pallas_call(
        functools.partial(_reduce_kernel, rows=R, inv_n=1.0 / n),
        out_shape=jax.ShapeDtypeStruct((B, 1, 1), jnp.float32),
        grid_spec=pltpu.PrefetchScalarGridSpec(
            num_scalar_prefetch=0,
            grid=grid_r,
            in_specs=[pl.BlockSpec((None, ts_r, C), lambda b, r: (b, r, 0))],
            out_specs=pl.BlockSpec((None, 1, 1), lambda b, r: (b, 0, 0)),
        ),
        compiler_params=pltpu.CompilerParams(
            dimension_semantics=("parallel", "arbitrary"),
            vmem_limit_bytes=_vmem_limit(2 * ts_r * C * xb),
        ),
    )(x2)

    # ------------- pass 2: out = scale * x * inv -------------
    ts_a = _pick_tile_rows(R, C, xb + sb + ob)
    grid_a = (pl.cdiv(R, ts_a), B)      # row tiles outermost => scale tile reused across b
    out2 = pl.pallas_call(
        _apply_kernel,
        out_shape=jax.ShapeDtypeStruct((B, R, C), out_dtype),
        grid_spec=pltpu.PrefetchScalarGridSpec(
            num_scalar_prefetch=0,
            grid=grid_a,
            in_specs=[
                pl.BlockSpec((None, ts_a, C), lambda r, b: (b, r, 0)),   # x
                pl.BlockSpec((ts_a, C), lambda r, b: (r, 0)),            # scale
                pl.BlockSpec((None, 1, 1), lambda r, b: (b, 0, 0)),      # inv
            ],
            out_specs=pl.BlockSpec((None, ts_a, C), lambda r, b: (b, r, 0)),
        ),
        compiler_params=pltpu.CompilerParams(
            dimension_semantics=("parallel", "parallel"),
            vmem_limit_bytes=_vmem_limit(2 * ts_a * C * (xb + sb + ob)),
        ),
    )(x2, scale2, inv)

    return out2.reshape(B, S, D)


def rmsnorm_ref(x, scale):
    # pure-JAX reference mirroring the PyTorch forward
    S = x.shape[1]
    n = x[0].size
    ff_rms = jnp.linalg.norm(x.astype(jnp.float32), axis=(1, 2)) * n ** (-0.5)
    raw = x / ff_rms[:, None, None]
    return scale[:S, :][None, :, :] * raw


if __name__ == "__main__":
    key = jax.random.PRNGKey(0)
    kx, ks = jax.random.split(key)
    B, S, D = 2, 8, 32
    x = jax.random.normal(kx, (B, S, D), dtype=jnp.float32)
    # Module init is torch.ones(layer_shape); perturb slightly so the scale path
    # is actually exercised (reference uses the same scale, so semantics match).
    scale = 1.0 + 0.1 * jax.random.normal(ks, (S, D), dtype=jnp.float32)

    out = rmsnorm(x, scale)
    jax.block_until_ready(out)

    ref = rmsnorm_ref(x, scale)
    assert out.shape == (B, S, D)
    assert jnp.allclose(out, ref, atol=1e-5, rtol=1e-5)
    print("KERNEL_OK")
</pallas_src>

<mosaic_0001>
module attributes {stable_mosaic.version = 11 : i64} {
  func.func @_reduce_kernel(%arg0: i32, %arg1: i32, %arg2: memref<1x2x128xf32, #tpu.memory_space<vmem>>, %arg3: memref<1x1x1xf32, #tpu.memory_space<vmem>>) attributes {dimension_semantics = [#tpu.dimension_semantics<parallel>, #tpu.dimension_semantics<arbitrary>], iteration_bounds = array<i64: 2, 1>, scalar_prefetch = 0 : i64, scratch_operands = 0 : i64, tpu.core_type = #tpu.core_type<tc>, window_params = [{transform_indices = @transform_0, window_bounds = array<i64: 1, 2, 128>}, {transform_indices = @transform_1, window_bounds = array<i64: 1, 1, 1>}]} {
    %c0_i32 = arith.constant 0 : i32
    %0 = arith.cmpi eq, %arg1, %c0_i32 : i32
    %1 = arith.extui %0 : i1 to i32
    %c0_i32_0 = arith.constant 0 : i32
    %2 = arith.cmpi ne, %1, %c0_i32_0 : i32
    scf.if %2 {
      %cst_11 = arith.constant 0.000000e+00 : f32
      %20 = vector.broadcast %cst_11 : f32 to vector<1x1xf32>
      %c0_12 = arith.constant 0 : index
      %c0_13 = arith.constant 0 : index
      %c0_14 = arith.constant 0 : index
      %21 = vector.load %arg3[%c0_12, %c0_13, %c0_14] : memref<1x1x1xf32, #tpu.memory_space<vmem>>, vector<1x1x1xf32>
      %22 = vector.shape_cast %21 : vector<1x1x1xf32> to vector<1x1xf32>
      %23 = vector.shape_cast %20 : vector<1x1xf32> to vector<1x1x1xf32>
      tpu.vector_store %arg3[%c0_12, %c0_13, %c0_14], %23 {strides = array<i32>} : memref<1x1x1xf32, #tpu.memory_space<vmem>>, vector<1x1x1xf32>,
    } else {
    }
    %c0 = arith.constant 0 : index
    %c0_1 = arith.constant 0 : index
    %c0_2 = arith.constant 0 : index
    %3 = vector.load %arg2[%c0, %c0_1, %c0_2] : memref<1x2x128xf32, #tpu.memory_space<vmem>>, vector<1x2x128xf32>
    %4 = vector.shape_cast %3 : vector<1x2x128xf32> to vector<2x128xf32>
    %c0_3 = arith.constant 0 : index
    %c0_4 = arith.constant 0 : index
    %c0_5 = arith.constant 0 : index
    %5 = vector.load %arg3[%c0_3, %c0_4, %c0_5] : memref<1x1x1xf32, #tpu.memory_space<vmem>>, vector<1x1x1xf32>
    %6 = vector.shape_cast %5 : vector<1x1x1xf32> to vector<1x1xf32>
    %7 = arith.mulf %4, %4 : vector<2x128xf32>
    %8 = vector.shape_cast %7 : vector<2x128xf32> to vector<1x2x128xf32>
    %cst = arith.constant dense<0.000000e+00> : vector<1xf32>
    %9 = vector.multi_reduction <add>, %8, %cst [1, 2] : vector<1x2x128xf32> to vector<1xf32>
    %10 = vector.shape_cast %9 : vector<1xf32> to vector<1x1x1xf32>
    %11 = vector.extract %10[0, 0, 0] : f32 from vector<1x1x1xf32>
    %12 = vector.broadcast %11 : f32 to vector<1x1xf32>
    %13 = arith.addf %6, %12 : vector<1x1xf32>
    %c0_6 = arith.constant 0 : index
    %c0_7 = arith.constant 0 : index
    %c0_8 = arith.constant 0 : index
    %14 = vector.load %arg3[%c0_6, %c0_7, %c0_8] : memref<1x1x1xf32, #tpu.memory_space<vmem>>, vector<1x1x1xf32>
    %15 = vector.shape_cast %14 : vector<1x1x1xf32> to vector<1x1xf32>
    %16 = vector.shape_cast %13 : vector<1x1xf32> to vector<1x1x1xf32>
    tpu.vector_store %arg3[%c0_6, %c0_7, %c0_8], %16 {strides = array<i32>} : memref<1x1x1xf32, #tpu.memory_space<vmem>>, vector<1x1x1xf32>,
    %c0_i32_9 = arith.constant 0 : i32
    %17 = arith.cmpi eq, %arg1, %c0_i32_9 : i32
    %18 = arith.extui %17 : i1 to i32
    %c0_i32_10 = arith.constant 0 : i32
    %19 = arith.cmpi ne, %18, %c0_i32_10 : i32
    scf.if %19 {
      %c0_11 = arith.constant 0 : index
      %c0_12 = arith.constant 0 : index
      %c0_13 = arith.constant 0 : index
      %20 = vector.load %arg3[%c0_11, %c0_12, %c0_13] : memref<1x1x1xf32, #tpu.memory_space<vmem>>, vector<1x1x1xf32>
      %21 = vector.shape_cast %20 : vector<1x1x1xf32> to vector<1x1xf32>
      %cst_14 = arith.constant 3.906250e-03 : f32
      %22 = vector.broadcast %cst_14 : f32 to vector<1x1xf32>
      %23 = arith.mulf %21, %22 : vector<1x1xf32>
      %24 = math.rsqrt %23 : vector<1x1xf32>
      %c0_15 = arith.constant 0 : index
      %c0_16 = arith.constant 0 : index
      %c0_17 = arith.constant 0 : index
      %25 = vector.load %arg3[%c0_15, %c0_16, %c0_17] : memref<1x1x1xf32, #tpu.memory_space<vmem>>, vector<1x1x1xf32>
      %26 = vector.shape_cast %25 : vector<1x1x1xf32> to vector<1x1xf32>
      %27 = vector.shape_cast %24 : vector<1x1xf32> to vector<1x1x1xf32>
      tpu.vector_store %arg3[%c0_15, %c0_16, %c0_17], %27 {strides = array<i32>} : memref<1x1x1xf32, #tpu.memory_space<vmem>>, vector<1x1x1xf32>,
    } else {
    }
    return
  }
  func.func @transform_0(%arg0: i32, %arg1: i32) -> (i32, i32, i32) {
    %c0_i32 = arith.constant 0 : i32
    %c0_i32_0 = arith.constant 0 : i32
    return %arg0, %arg1, %c0_i32 : i32, i32, i32
  }
  func.func @transform_1(%arg0: i32, %arg1: i32) -> (i32, i32, i32) {
    %c0_i32 = arith.constant 0 : i32
    %c0_i32_0 = arith.constant 0 : i32
    %c0_i32_1 = arith.constant 0 : i32
    return %arg0, %c0_i32, %c0_i32_0 : i32, i32, i32
  }
}

</mosaic_0001>

<llo_original>
// kernel: tpu_custom_call.1
$region0: #{tpu_custom_call.1}
  #allocation0 [shape = 'u32[]', space=smem, size = 0x4, offset = 0x4, fixed_abs, tag = 'smem constant byte address 0x4 - core index']
  #allocation1 [shape = 'u32[144,128]{1,0:T(1,128)}', space=vmem, size = 0x12000, scoped, tag = 'internal scratch']
  %s0 = inlined_call_operand.hbm [shape: f32[2,2,128], index: 0, kind: input, shape index: {}]
  %s1 = inlined_call_operand.vmem [shape: f32[2,1,1], index: 1, kind: output, shape index: {}]
  %s2 = sld [smem:[#allocation0]]
  $region49: #{tpu_custom_call.1} parent=0
    _
  %s4 = ssub.s32 1, %s2
  %s5 = scalar_select 0, %s4, %s2
  $region1: #{tpu_custom_call.1} parent=0
    #allocation2 [shape = 'u8[2048]{0}', space=vmem, size = 0x800, scoped, tag = 'input window, operand 0']
    #allocation3 [shape = 's32[2]{0}', space=sflag, size = 0x8, scoped, tag = 'scoped memory for tpu_custom_call.1']
    %6 = vsyncpa [#allocation3], 0
    %s7 = scalar_lea.sflag [#allocation3], 1
    %8 = vsyncpa %s7, 0
    loop: start=0, step=1, limit=4
    $region2: #{tpu_custom_call.1} parent=1 // loop_pre_header
      _
    $region3: #{tpu_custom_call.1} parent=1 // loop_header
      %s10 = sphi 0, %s14
      %p11 = scmp.ge.s32.totalorder %s10, 4
      %s17 = sphi 0, %s29
      %s18 = sphi 0, %s25
      %s19 = sphi 0, %s17
      %s20 = sphi 0, %s18
      %s21 = sphi 0, %s19
      %s22 = sphi 0, %s20
      %s34 = sphi 0, %s36
      %s37 = sphi 0, %s34
      %s38 = sphi 0, %s37
      %s54 = sphi 0, %s38
      %s60 = sphi 0, %s62
      %s63 = sphi 0, %s60
      %s64 = sphi 0, %s63
      %s80 = sphi 0, %s64
    $region4: #{tpu_custom_call.1} parent=1 // loop_header_branch
      %13 = sbr.rel (%p11) target = $region8
    $region5: #{tpu_custom_call.1} parent=1 // loop_body
      %s15 = ssub.s32 %s10, 1
      %s16 = ssub.s32 %s10, 2
      %s23 = sadd.s32 1, %s18
      %p24 = scmp.ge.s32.totalorder %s23, 1
      %s25 = scalar_select %p24, 0, %s23
      %s26 = sadd.s32 1, %s17
      %s27 = scalar_select %p24, %s26, %s17
      %p28 = scmp.ge.s32.totalorder %s27, 2
      %s29 = scalar_select %p28, 0, %s27
      %s30 = ssub.s32 %s17, %s29
      %s31 = ssub.s32 %s18, %s25
      %s32 = sor.u32 %s30, %s31
      %p33 = scmp.eq.s32.totalorder %s32, 0
      %s35 = sadd.s32 %s34, 1
      %s36 = scalar_select %p33, %s34, %s35
      %p39 = pneg %p33
      %p40 = scmp.eq.s32.totalorder %s10, 1
      %p41 = por %p39, %p40
      %p42 = scmp.ne.s32.totalorder %s34, %s37
      %p43 = scmp.eq.s32.totalorder %s10, 0
      %p44 = por %p42, %p43
      %p45 = scmp.ne.s32.totalorder %s34, %s37
      %p46 = scmp.eq.s32.totalorder %s15, 1
      %p47 = por %p45, %p46
      %p48 = scmp.ne.s32.totalorder %s37, %s38
      %p49 = scmp.eq.s32.totalorder %s15, 0
      %p50 = por %p48, %p49
      %p51 = scmp.ne.s32.totalorder %s37, %s38
      %p52 = scmp.eq.s32.totalorder %s16, 1
      %p53 = por %p51, %p52
      %p55 = scmp.ne.s32.totalorder %s38, %s54
      %p56 = scmp.eq.s32.totalorder %s16, 0
      %p57 = por %p55, %p56
      %s58 = ssub.s32 %s17, %s29
      %p59 = scmp.eq.s32.totalorder %s58, 0
      %s61 = sadd.s32 %s60, 1
      %s62 = scalar_select %p59, %s60, %s61
      %p65 = pneg %p59
      %p66 = scmp.eq.s32.totalorder %s10, 1
      %p67 = por %p65, %p66
      %p68 = scmp.ne.s32.totalorder %s60, %s63
      %p69 = scmp.eq.s32.totalorder %s10, 0
      %p70 = por %p68, %p69
      %p71 = scmp.ne.s32.totalorder %s60, %s63
      %p72 = scmp.eq.s32.totalorder %s15, 1
      %p73 = por %p71, %p72
      %p74 = scmp.ne.s32.totalorder %s63, %s64
      %p75 = scmp.eq.s32.totalorder %s15, 0
      %p76 = por %p74, %p75
      %p77 = scmp.ne.s32.totalorder %s63, %s64
      %p78 = scmp.eq.s32.totalorder %s16, 1
      %p79 = por %p77, %p78
      %p81 = scmp.ne.s32.totalorder %s64, %s80
      %p82 = scmp.eq.s32.totalorder %s16, 0
      %p83 = por %p81, %p82
      %p84 = scmp.le.s32.totalorder 1, %s10
      %p85 = scmp.lt.s32.totalorder %s10, 3
      %p86 = pnand %p84, %p85
      %p87 = pneg %p86
      // Predicated region
      $region9: #{tpu_custom_call.1} parent=5 // pred_check
        _
      $region10: #{tpu_custom_call.1} parent=5 // pred_check_branch
        %89 = sbr.rel (%p86) target = $region12
      $region11: #{tpu_custom_call.1} parent=5 // pred_region
        %s90 = ssub.s32 %s10, 1
      $region12: #{tpu_custom_call.1} parent=5 // pred_fallthru
        _
      %p91 = scmp.lt.s32.totalorder %s10, 2
      // Predicated region
      $region13: #{tpu_custom_call.1} parent=5 // pred_check
        %p92 = pneg %p91
      $region14: #{tpu_custom_call.1} parent=5 // pred_check_branch
        %94 = sbr.rel (%p92) target = $region16
      $region15: #{tpu_custom_call.1} parent=5 // pred_region
        // Predicated region
        $region17: #{tpu_custom_call.1} parent=15 // pred_check
          %p95 = pneg %p44
        $region18: #{tpu_custom_call.1} parent=15 // pred_check_branch
          %97 = sbr.rel (%p95) target = $region20
        $region19: #{tpu_custom_call.1} parent=15 // pred_region
          %s98 = sand.u32 %s34, 1
          %s99 = scalar_lea.sflag [#allocation3], %s98
          %s100 = sand.u32 %s34, 1
          %s101 = smul.addr %s100, 2
          %s102 = scalar_lea.vmem [#allocation2], %s101
          %s104 = ssub.s32 32, 32
          %105 = vsyncadd %s99, %s104
          %s106 = sadd.s32 %s18, %s17
          %s107 = smul.addr %s106, 32
          %s108 = scalar_lea.hbm %s0, %s107
          %s110 = sshll.u32 %s102, 4
          %s111 = int_to_ptr.vmem [resolvable:$true] %s110
          %113 = dma.hbm_to_vmem [thread:$0]  %s108, 32, %s111, %s99
        $region20: #{tpu_custom_call.1} parent=15 // pred_fallthru
          _
      $region16: #{tpu_custom_call.1} parent=5 // pred_fallthru
        _
      %p114 = scmp.le.s32.totalorder 1, %s10
      %p115 = scmp.lt.s32.totalorder %s10, 3
      %p116 = pnand %p114, %p115
      %p117 = pneg %p116
      // Predicated region
      $region21: #{tpu_custom_call.1} parent=5 // pred_check
        _
      $region22: #{tpu_custom_call.1} parent=5 // pred_check_branch
        %119 = sbr.rel (%p116) target = $region24
      $region23: #{tpu_custom_call.1} parent=5 // pred_region
        %s120 = ssub.s32 %s10, 1
        %s121 = sand.u32 %s37, 1
        %s122 = scalar_lea.sflag [#allocation3], %s121
        %s123 = sand.u32 %s37, 1
        %s124 = smul.addr %s123, 2
        %s125 = scalar_lea.vmem [#allocation2], %s124
        // Predicated region
        $region25: #{tpu_custom_call.1} parent=23 // pred_check
          %p126 = pneg %p50
        $region26: #{tpu_custom_call.1} parent=23 // pred_check_branch
          %128 = sbr.rel (%p126) target = $region28
        $region27: #{tpu_custom_call.1} parent=23 // pred_region
          %129 = dma.done %s122, 32
        $region28: #{tpu_custom_call.1} parent=23 // pred_fallthru
          _
        %s130 = sand.u32 %s37, 1
        %s131 = scalar_lea.sflag [#allocation3], %s130
        %s132 = sand.u32 %s37, 1
        %s133 = smul.addr %s132, 2
        %s134 = scalar_lea.vmem [#allocation2], %s133
        %p135 = pneg %p50
        %p136 = pneg %p47
        %p137 = pneg %p76
        %p138 = pneg %p73
        %p139 = scmp.lt.s32.totalorder %s19, 1
        %s140 = scalar_select %p139, %s19, 1
        %s141 = scalar_lea.vmem %s1, %s140
        %p142 = scmp.lt.s32.totalorder %s19, 1
        %s143 = scalar_select %p142, %s19, 1
        %s144 = scalar_lea.vmem %s1, %s143
        %p145 = scmp.eq.s32.totalorder %s20, 0
        // Predicated region
        $region29: #{tpu_custom_call.1} parent=23 // pred_check
          %p146 = pneg %p145
        $region30: #{tpu_custom_call.1} parent=23 // pred_check_branch
          %148 = sbr.rel (%p146) target = $region32
        $region31: #{tpu_custom_call.1} parent=23 // pred_region
          %vm149 = vcmask 0
          %150 = vst.msk [vmem:[%s144] sm:$0x1] %vm149, 0.0
        $region32: #{tpu_custom_call.1} parent=23 // pred_fallthru
          _
        %v151 = vld [vmem:[%s125] sm:$0x3]
        %v152 = vld [vmem:[%s144] sm:$0x1]
        %v153 = vmul.f32 %v151, %v151
        %vm154 = vcmask 1041408
        %v155 = vsel %vm154, %v153, 0.0
        %156 = vadd.xlane.f32.xlu0 %v155
        %v157 = vpop.xlane.xlu0 %156
        %v158 = vrot.slane %v157, 4
        %v159 = vadd.f32 %v157, %v158
        %v160 = vrot.slane %v159, 2
        %v161 = vadd.f32 %v159, %v160
        %v162 = vrot.slane %v161, 1
        %v163 = vadd.f32 %v161, %v162
        %s164 = vtos %v163
        %v165 = vstv %s164
        %v166 = vadd.f32 %v152, %v165
        %vm167 = vcmask 0
        %168 = vst.msk [vmem:[%s144] sm:$0x1] %vm167, %v166
        // Predicated region
        $region33: #{tpu_custom_call.1} parent=23 // pred_check
          %p169 = pneg %p145
        $region34: #{tpu_custom_call.1} parent=23 // pred_check_branch
          %171 = sbr.rel (%p169) target = $region36
        $region35: #{tpu_custom_call.1} parent=23 // pred_region
          %v172 = vld [vmem:[%s144] sm:$0x1]
          %v173 = vmul.f32 %v172, 0.00390625
          %v174 = vrsqrt.pop %v173
          %175 = vst.msk [vmem:[%s144] sm:$0x1] %vm167, %v174
        $region36: #{tpu_custom_call.1} parent=23 // pred_fallthru
          _
        %p176 = scmp.lt.s32.totalorder %s19, 1
        %s177 = scalar_select %p176, %s19, 1
        %s178 = scalar_lea.vmem %s1, %s177
        // Predicated region
        $region37: #{tpu_custom_call.1} parent=23 // pred_check
          %p179 = pneg %p73
        $region38: #{tpu_custom_call.1} parent=23 // pred_check_branch
          %181 = sbr.rel (%p179) target = $region40
        $region39: #{tpu_custom_call.1} parent=23 // pred_region
          _
        $region40: #{tpu_custom_call.1} parent=23 // pred_fallthru
          _
      $region24: #{tpu_custom_call.1} parent=5 // pred_fallthru
        _
      %p182 = scmp.le.s32.totalorder 2, %s10
      // Predicated region
      $region41: #{tpu_custom_call.1} parent=5 // pred_check
        %p183 = pneg %p182
      $region42: #{tpu_custom_call.1} parent=5 // pred_check_branch
        %185 = sbr.rel (%p183) target = $region44
      $region43: #{tpu_custom_call.1} parent=5 // pred_region
        %s186 = ssub.s32 %s10, 2
        // Predicated region
        $region45: #{tpu_custom_call.1} parent=43 // pred_check
          %p187 = pneg %p79
        $region46: #{tpu_custom_call.1} parent=43 // pred_check_branch
          %189 = sbr.rel (%p187) target = $region48
        $region47: #{tpu_custom_call.1} parent=43 // pred_region
          %p190 = scmp.lt.s32.totalorder %s21, 1
          %s191 = scalar_select %p190, %s21, 1
          %s192 = scalar_lea.vmem %s1, %s191
        $region48: #{tpu_custom_call.1} parent=43 // pred_fallthru
          _
      $region44: #{tpu_custom_call.1} parent=5 // pred_fallthru
        _
    $region6: #{tpu_custom_call.1} parent=1 // loop_footer
      %s14 = sadd.s32 1, %s10
    $region7: #{tpu_custom_call.1} parent=1 // loop_footer_branch
      %9 = sbr.rel target = $region3
    $region8: #{tpu_custom_call.1} parent=1 // loop_exit
      _
    %193 = vsyncpa [#allocation3], 1
    %s194 = scalar_lea.sflag [#allocation3], 1
    %195 = vsyncpa %s194, 1

</llo_original>
